<compile_context>
chip_gen: v7x
topology: tpu7x:2x2x1
jax: 0.10.0
libtpu: 0.0.40
codegen_flags: <defaults>
</compile_context>

<pallas_src>
import jax
import jax.numpy as jnp
from jax.experimental import pallas as pl
from jax.experimental.pallas import tpu as pltpu

_SUBLANE = 8  # f32 sublane width


def lstm_kernel(x_ref, wih_ref, whh_ref, b_ref, h_out_ref):
    """Full LSTM recurrence in one kernel; returns the last hidden state.

    x_ref    : (T*Bp, D)  time-major input, flattened over (T, Bp), Bp % 8 == 0
    wih_ref  : (D, 4H)    input->hidden weights (transposed, gate order i,f,g,o)
    whh_ref  : (H, 4H)    hidden->hidden weights (transposed)
    b_ref    : (1, 4H)    b_ih + b_hh
    h_out_ref: (Bp, H)    h_T
    """
    TB, _ = x_ref.shape
    H = whh_ref.shape[0]
    Bp = h_out_ref.shape[0]
    T = TB // Bp

    # ---- hoisted input projection: one big MXU matmul for ALL timesteps ----
    gx_all = (
        jnp.dot(x_ref[...], wih_ref[...], preferred_element_type=jnp.float32)
        + b_ref[...]
    )  # (T*Bp, 4H); each t-slice is an aligned (Bp, 4H) tile since Bp % 8 == 0

    # Recurrent weights kept resident in vregs across the unrolled loop.
    whh = whh_ref[...]

    # Hoisted per-lane affine constants implementing the exact identity
    #   sigmoid(x) = 0.5 * (tanh(0.5 * x) + 1)
    # on the i/f/o lanes while leaving the g lanes ([2H, 3H)) as plain tanh,
    # so each step needs a single full-width tanh for all four gates.
    lane = jax.lax.broadcasted_iota(jnp.int32, (Bp, 4 * H), 1)
    is_g = (lane >= 2 * H) & (lane < 3 * H)
    pre_scale = jnp.where(is_g, 1.0, 0.5).astype(jnp.float32)   # x or x/2
    post_scale = pre_scale                                      # 1 or 0.5
    post_bias = jnp.where(is_g, 0.0, 0.5).astype(jnp.float32)   # +0 or +0.5

    # Register-carried recurrent state (no VMEM round-trips inside the loop).
    h = jnp.zeros((Bp, H), jnp.float32)
    c = jnp.zeros((Bp, H), jnp.float32)

    # Static, fully-unrolled recurrence (T is a compile-time constant).
    for t in range(T):
        gates = gx_all[t * Bp:(t + 1) * Bp, :] + jnp.dot(
            h.astype(whh.dtype), whh, preferred_element_type=jnp.float32
        )  # (Bp, 4H), gate order i, f, g, o (PyTorch convention)
        # Single full-width tanh on the 128-lane tile + hoisted affine fix.
        act = jnp.tanh(gates * pre_scale) * post_scale + post_bias
        i_g = act[:, 0 * H:1 * H]
        f_g = act[:, 1 * H:2 * H]
        g_g = act[:, 2 * H:3 * H]
        o_g = act[:, 3 * H:4 * H]
        c = f_g * c + i_g * g_g
        h = o_g * jnp.tanh(c)

    h_out_ref[...] = h.astype(h_out_ref.dtype)


def lstm_forward(x, w_ih, w_hh, b_ih, b_hh, w_lin, b_lin, mxu_dtype=jnp.float32):
    """x: (B, T, D) batch-first (PyTorch convention). Returns (B,) like forward().

    mxu_dtype: dtype of the MXU operands (x / W_ih / W_hh).  Keep f32 for
    bit-accurate parity with the f32 reference; bf16 is the production path
    on v6e/v7x (gate math stays f32 either way).
    """
    B, T, D = x.shape
    H = w_hh.shape[1]

    # Pad batch to the f32 sublane width so every vreg / t-slice is aligned.
    Bp = max(_SUBLANE, ((B + _SUBLANE - 1) // _SUBLANE) * _SUBLANE)
    x_p = jnp.zeros((Bp, T, D), jnp.float32).at[:B].set(x.astype(jnp.float32))

    # Layout glue in plain JAX: time-major + flattened so the kernel's hoisted
    # projection is one (T*Bp, D) @ (D, 4H) matmul; weights pre-transposed so
    # every in-kernel matmul is a plain (rows, K) @ (K, N) MXU dot.
    x_tmaj = jnp.transpose(x_p, (1, 0, 2)).reshape(T * Bp, D).astype(mxu_dtype)
    wih_t = jnp.transpose(w_ih).astype(mxu_dtype)               # (D, 4H)
    whh_t = jnp.transpose(w_hh).astype(mxu_dtype)               # (H, 4H)
    b = (b_ih + b_hh).reshape(1, 4 * H).astype(jnp.float32)     # (1, 4H)

    vmem = pl.BlockSpec(memory_space=pltpu.MemorySpace.VMEM)
    h_last = pl.pallas_call(
        lstm_kernel,
        out_shape=jax.ShapeDtypeStruct((Bp, H), jnp.float32),
        in_specs=[vmem] * 4,
        out_specs=vmem,
    )(x_tmaj, wih_t, whh_t, b)

    # Final Linear head (H -> 1) on the real batch rows, in the wrapper: the
    # degenerate N=1 matmul is not worth an MXU pass / masked 1-lane store.
    h_last = h_last[:B]
    out = h_last @ jnp.transpose(w_lin).astype(jnp.float32) + b_lin.astype(jnp.float32)
    return jnp.squeeze(out, axis=-1)  # matches `.squeeze()` for B > 1


def lstm_reference(x, w_ih, w_hh, b_ih, b_hh, w_lin, b_lin):
    """Pure-JAX reference replicating torch.nn.LSTM + Linear semantics."""
    B, T, D = x.shape
    H = w_hh.shape[1]
    h = jnp.zeros((B, H), jnp.float32)
    c = jnp.zeros((B, H), jnp.float32)
    for t in range(T):
        gates = x[:, t, :] @ w_ih.T + b_ih + h @ w_hh.T + b_hh
        i = jax.nn.sigmoid(gates[:, 0 * H:1 * H])
        f = jax.nn.sigmoid(gates[:, 1 * H:2 * H])
        g = jnp.tanh(gates[:, 2 * H:3 * H])
        o = jax.nn.sigmoid(gates[:, 3 * H:4 * H])
        c = f * c + i * g
        h = o * jnp.tanh(c)
    return (h @ w_lin.T + b_lin).squeeze(-1)


if __name__ == "__main__":
    # small shapes consistent with the module: batch=2, seq=8, input_dim=4, hidden=32
    B, T, D, H = 2, 8, 4, 32

    key = jax.random.PRNGKey(0)
    ks = jax.random.split(key, 7)
    bound = 1.0 / (H ** 0.5)  # PyTorch-style U(-1/sqrt(H), 1/sqrt(H)) init
    w_ih = jax.random.uniform(ks[0], (4 * H, D), jnp.float32, -bound, bound)
    w_hh = jax.random.uniform(ks[1], (4 * H, H), jnp.float32, -bound, bound)
    b_ih = jax.random.uniform(ks[2], (4 * H,), jnp.float32, -bound, bound)
    b_hh = jax.random.uniform(ks[3], (4 * H,), jnp.float32, -bound, bound)
    w_lin = jax.random.uniform(ks[4], (1, H), jnp.float32, -bound, bound)
    b_lin = jax.random.uniform(ks[5], (1,), jnp.float32, -bound, bound)
    x = jax.random.normal(ks[6], (B, T, D), jnp.float32)

    out = lstm_forward(x, w_ih, w_hh, b_ih, b_hh, w_lin, b_lin)
    out = jax.block_until_ready(out)

    ref = lstm_reference(x, w_ih, w_hh, b_ih, b_hh, w_lin, b_lin)
    assert out.shape == (B,), out.shape
    assert jnp.allclose(out, ref, atol=1e-5, rtol=1e-5), (out, ref)

    print("KERNEL_OK")
</pallas_src>

<mosaic_0001>
module attributes {stable_mosaic.version = 11 : i64} {
  func.func @lstm_kernel(%arg0: memref<64x4xf32, #tpu.memory_space<vmem>>, %arg1: memref<4x128xf32, #tpu.memory_space<vmem>>, %arg2: memref<32x128xf32, #tpu.memory_space<vmem>>, %arg3: memref<1x128xf32, #tpu.memory_space<vmem>>, %arg4: memref<8x32xf32, #tpu.memory_space<vmem>>) attributes {dimension_semantics = [], scalar_prefetch = 0 : i64, scratch_operands = 0 : i64, tpu.core_type = #tpu.core_type<tc>} {
    %c0 = arith.constant 0 : index
    %c0_0 = arith.constant 0 : index
    %0 = vector.load %arg0[%c0, %c0_0] : memref<64x4xf32, #tpu.memory_space<vmem>>, vector<64x4xf32>
    %c0_1 = arith.constant 0 : index
    %c0_2 = arith.constant 0 : index
    %1 = vector.load %arg1[%c0_1, %c0_2] : memref<4x128xf32, #tpu.memory_space<vmem>>, vector<4x128xf32>
    %cst = arith.constant dense<0.000000e+00> : vector<64x128xf32>
    %2 = tpu.matmul %0, %1, %cst {dimension_numbers = #tpu.dot_dimension_numbers<[1], [0], [0], [1], [0, 0, 1, 1], [], []>} : vector<64x4xf32>, vector<4x128xf32>, vector<64x128xf32> -> vector<64x128xf32>
    %c0_3 = arith.constant 0 : index
    %c0_4 = arith.constant 0 : index
    %3 = vector.load %arg3[%c0_3, %c0_4] : memref<1x128xf32, #tpu.memory_space<vmem>>, vector<1x128xf32>
    %4 = vector.broadcast %3 : vector<1x128xf32> to vector<64x128xf32>
    %5 = arith.addf %2, %4 : vector<64x128xf32>
    %c0_5 = arith.constant 0 : index
    %c0_6 = arith.constant 0 : index
    %6 = vector.load %arg2[%c0_5, %c0_6] : memref<32x128xf32, #tpu.memory_space<vmem>>, vector<32x128xf32>
    %7 = tpu.iota {dimensions = array<i32: 1>} : vector<8x128xi32>
    %c64_i32 = arith.constant 64 : i32
    %8 = vector.broadcast %c64_i32 : i32 to vector<8x128xi32>
    %9 = arith.cmpi sge, %7, %8 : vector<8x128xi32>
    %c96_i32 = arith.constant 96 : i32
    %10 = vector.broadcast %c96_i32 : i32 to vector<8x128xi32>
    %11 = arith.cmpi slt, %7, %10 : vector<8x128xi32>
    %12 = arith.andi %9, %11 : vector<8x128xi1>
    %cst_7 = arith.constant 1.000000e+00 : f32
    %cst_8 = arith.constant 5.000000e-01 : f32
    %13 = vector.broadcast %cst_7 : f32 to vector<8x128xf32>
    %14 = vector.broadcast %cst_8 : f32 to vector<8x128xf32>
    %15 = arith.select %12, %13, %14 : vector<8x128xi1>, vector<8x128xf32>
    %cst_9 = arith.constant 0.000000e+00 : f32
    %cst_10 = arith.constant 5.000000e-01 : f32
    %16 = vector.broadcast %cst_9 : f32 to vector<8x128xf32>
    %17 = vector.broadcast %cst_10 : f32 to vector<8x128xf32>
    %18 = arith.select %12, %16, %17 : vector<8x128xi1>, vector<8x128xf32>
    %cst_11 = arith.constant 0.000000e+00 : f32
    %19 = vector.broadcast %cst_11 : f32 to vector<8x32xf32>
    %cst_12 = arith.constant 0.000000e+00 : f32
    %20 = vector.broadcast %cst_12 : f32 to vector<8x32xf32>
    %21 = vector.extract_strided_slice %5 {offsets = [0, 0], sizes = [8, 128], strides = [1, 1]} : vector<64x128xf32> to vector<8x128xf32>
    %cst_13 = arith.constant dense<0.000000e+00> : vector<8x128xf32>
    %22 = tpu.matmul %19, %6, %cst_13 {dimension_numbers = #tpu.dot_dimension_numbers<[1], [0], [0], [1], [0, 0, 1, 1], [], []>} : vector<8x32xf32>, vector<32x128xf32>, vector<8x128xf32> -> vector<8x128xf32>
    %23 = arith.addf %21, %22 : vector<8x128xf32>
    %24 = arith.mulf %23, %15 : vector<8x128xf32>
    %25 = math.tanh %24 : vector<8x128xf32>
    %26 = arith.mulf %25, %15 : vector<8x128xf32>
    %27 = arith.addf %26, %18 : vector<8x128xf32>
    %28 = vector.extract_strided_slice %27 {offsets = [0, 0], sizes = [8, 32], strides = [1, 1]} : vector<8x128xf32> to vector<8x32xf32>
    %29 = vector.extract_strided_slice %27 {offsets = [0, 32], sizes = [8, 32], strides = [1, 1]} : vector<8x128xf32> to vector<8x32xf32>
    %30 = vector.extract_strided_slice %27 {offsets = [0, 64], sizes = [8, 32], strides = [1, 1]} : vector<8x128xf32> to vector<8x32xf32>
    %31 = vector.extract_strided_slice %27 {offsets = [0, 96], sizes = [8, 32], strides = [1, 1]} : vector<8x128xf32> to vector<8x32xf32>
    %32 = arith.mulf %29, %20 : vector<8x32xf32>
    %33 = arith.mulf %28, %30 : vector<8x32xf32>
    %34 = arith.addf %32, %33 : vector<8x32xf32>
    %35 = math.tanh %34 : vector<8x32xf32>
    %36 = arith.mulf %31, %35 : vector<8x32xf32>
    %37 = vector.extract_strided_slice %5 {offsets = [8, 0], sizes = [8, 128], strides = [1, 1]} : vector<64x128xf32> to vector<8x128xf32>
    %cst_14 = arith.constant dense<0.000000e+00> : vector<8x128xf32>
    %38 = tpu.matmul %36, %6, %cst_14 {dimension_numbers = #tpu.dot_dimension_numbers<[1], [0], [0], [1], [0, 0, 1, 1], [], []>} : vector<8x32xf32>, vector<32x128xf32>, vector<8x128xf32> -> vector<8x128xf32>
    %39 = arith.addf %37, %38 : vector<8x128xf32>
    %40 = arith.mulf %39, %15 : vector<8x128xf32>
    %41 = math.tanh %40 : vector<8x128xf32>
    %42 = arith.mulf %41, %15 : vector<8x128xf32>
    %43 = arith.addf %42, %18 : vector<8x128xf32>
    %44 = vector.extract_strided_slice %43 {offsets = [0, 0], sizes = [8, 32], strides = [1, 1]} : vector<8x128xf32> to vector<8x32xf32>
    %45 = vector.extract_strided_slice %43 {offsets = [0, 32], sizes = [8, 32], strides = [1, 1]} : vector<8x128xf32> to vector<8x32xf32>
    %46 = vector.extract_strided_slice %43 {offsets = [0, 64], sizes = [8, 32], strides = [1, 1]} : vector<8x128xf32> to vector<8x32xf32>
    %47 = vector.extract_strided_slice %43 {offsets = [0, 96], sizes = [8, 32], strides = [1, 1]} : vector<8x128xf32> to vector<8x32xf32>
    %48 = arith.mulf %45, %34 : vector<8x32xf32>
    %49 = arith.mulf %44, %46 : vector<8x32xf32>
    %50 = arith.addf %48, %49 : vector<8x32xf32>
    %51 = math.tanh %50 : vector<8x32xf32>
    %52 = arith.mulf %47, %51 : vector<8x32xf32>
    %53 = vector.extract_strided_slice %5 {offsets = [16, 0], sizes = [8, 128], strides = [1, 1]} : vector<64x128xf32> to vector<8x128xf32>
    %cst_15 = arith.constant dense<0.000000e+00> : vector<8x128xf32>
    %54 = tpu.matmul %52, %6, %cst_15 {dimension_numbers = #tpu.dot_dimension_numbers<[1], [0], [0], [1], [0, 0, 1, 1], [], []>} : vector<8x32xf32>, vector<32x128xf32>, vector<8x128xf32> -> vector<8x128xf32>
    %55 = arith.addf %53, %54 : vector<8x128xf32>
    %56 = arith.mulf %55, %15 : vector<8x128xf32>
    %57 = math.tanh %56 : vector<8x128xf32>
    %58 = arith.mulf %57, %15 : vector<8x128xf32>
    %59 = arith.addf %58, %18 : vector<8x128xf32>
    %60 = vector.extract_strided_slice %59 {offsets = [0, 0], sizes = [8, 32], strides = [1, 1]} : vector<8x128xf32> to vector<8x32xf32>
    %61 = vector.extract_strided_slice %59 {offsets = [0, 32], sizes = [8, 32], strides = [1, 1]} : vector<8x128xf32> to vector<8x32xf32>
    %62 = vector.extract_strided_slice %59 {offsets = [0, 64], sizes = [8, 32], strides = [1, 1]} : vector<8x128xf32> to vector<8x32xf32>
    %63 = vector.extract_strided_slice %59 {offsets = [0, 96], sizes = [8, 32], strides = [1, 1]} : vector<8x128xf32> to vector<8x32xf32>
    %64 = arith.mulf %61, %50 : vector<8x32xf32>
    %65 = arith.mulf %60, %62 : vector<8x32xf32>
    %66 = arith.addf %64, %65 : vector<8x32xf32>
    %67 = math.tanh %66 : vector<8x32xf32>
    %68 = arith.mulf %63, %67 : vector<8x32xf32>
    %69 = vector.extract_strided_slice %5 {offsets = [24, 0], sizes = [8, 128], strides = [1, 1]} : vector<64x128xf32> to vector<8x128xf32>
    %cst_16 = arith.constant dense<0.000000e+00> : vector<8x128xf32>
    %70 = tpu.matmul %68, %6, %cst_16 {dimension_numbers = #tpu.dot_dimension_numbers<[1], [0], [0], [1], [0, 0, 1, 1], [], []>} : vector<8x32xf32>, vector<32x128xf32>, vector<8x128xf32> -> vector<8x128xf32>
    %71 = arith.addf %69, %70 : vector<8x128xf32>
    %72 = arith.mulf %71, %15 : vector<8x128xf32>
    %73 = math.tanh %72 : vector<8x128xf32>
    %74 = arith.mulf %73, %15 : vector<8x128xf32>
    %75 = arith.addf %74, %18 : vector<8x128xf32>
    %76 = vector.extract_strided_slice %75 {offsets = [0, 0], sizes = [8, 32], strides = [1, 1]} : vector<8x128xf32> to vector<8x32xf32>
    %77 = vector.extract_strided_slice %75 {offsets = [0, 32], sizes = [8, 32], strides = [1, 1]} : vector<8x128xf32> to vector<8x32xf32>
    %78 = vector.extract_strided_slice %75 {offsets = [0, 64], sizes = [8, 32], strides = [1, 1]} : vector<8x128xf32> to vector<8x32xf32>
    %79 = vector.extract_strided_slice %75 {offsets = [0, 96], sizes = [8, 32], strides = [1, 1]} : vector<8x128xf32> to vector<8x32xf32>
    %80 = arith.mulf %77, %66 : vector<8x32xf32>
    %81 = arith.mulf %76, %78 : vector<8x32xf32>
    %82 = arith.addf %80, %81 : vector<8x32xf32>
    %83 = math.tanh %82 : vector<8x32xf32>
    %84 = arith.mulf %79, %83 : vector<8x32xf32>
    %85 = vector.extract_strided_slice %5 {offsets = [32, 0], sizes = [8, 128], strides = [1, 1]} : vector<64x128xf32> to vector<8x128xf32>
    %cst_17 = arith.constant dense<0.000000e+00> : vector<8x128xf32>
    %86 = tpu.matmul %84, %6, %cst_17 {dimension_numbers = #tpu.dot_dimension_numbers<[1], [0], [0], [1], [0, 0, 1, 1], [], []>} : vector<8x32xf32>, vector<32x128xf32>, vector<8x128xf32> -> vector<8x128xf32>
    %87 = arith.addf %85, %86 : vector<8x128xf32>
    %88 = arith.mulf %87, %15 : vector<8x128xf32>
    %89 = math.tanh %88 : vector<8x128xf32>
    %90 = arith.mulf %89, %15 : vector<8x128xf32>
    %91 = arith.addf %90, %18 : vector<8x128xf32>
    %92 = vector.extract_strided_slice %91 {offsets = [0, 0], sizes = [8, 32], strides = [1, 1]} : vector<8x128xf32> to vector<8x32xf32>
    %93 = vector.extract_strided_slice %91 {offsets = [0, 32], sizes = [8, 32], strides = [1, 1]} : vector<8x128xf32> to vector<8x32xf32>
    %94 = vector.extract_strided_slice %91 {offsets = [0, 64], sizes = [8, 32], strides = [1, 1]} : vector<8x128xf32> to vector<8x32xf32>
    %95 = vector.extract_strided_slice %91 {offsets = [0, 96], sizes = [8, 32], strides = [1, 1]} : vector<8x128xf32> to vector<8x32xf32>
    %96 = arith.mulf %93, %82 : vector<8x32xf32>
    %97 = arith.mulf %92, %94 : vector<8x32xf32>
    %98 = arith.addf %96, %97 : vector<8x32xf32>
    %99 = math.tanh %98 : vector<8x32xf32>
    %100 = arith.mulf %95, %99 : vector<8x32xf32>
    %101 = vector.extract_strided_slice %5 {offsets = [40, 0], sizes = [8, 128], strides = [1, 1]} : vector<64x128xf32> to vector<8x128xf32>
    %cst_18 = arith.constant dense<0.000000e+00> : vector<8x128xf32>
    %102 = tpu.matmul %100, %6, %cst_18 {dimension_numbers = #tpu.dot_dimension_numbers<[1], [0], [0], [1], [0, 0, 1, 1], [], []>} : vector<8x32xf32>, vector<32x128xf32>, vector<8x128xf32> -> vector<8x128xf32>
    %103 = arith.addf %101, %102 : vector<8x128xf32>
    %104 = arith.mulf %103, %15 : vector<8x128xf32>
    %105 = math.tanh %104 : vector<8x128xf32>
    %106 = arith.mulf %105, %15 : vector<8x128xf32>
    %107 = arith.addf %106, %18 : vector<8x128xf32>
    %108 = vector.extract_strided_slice %107 {offsets = [0, 0], sizes = [8, 32], strides = [1, 1]} : vector<8x128xf32> to vector<8x32xf32>
    %109 = vector.extract_strided_slice %107 {offsets = [0, 32], sizes = [8, 32], strides = [1, 1]} : vector<8x128xf32> to vector<8x32xf32>
    %110 = vector.extract_strided_slice %107 {offsets = [0, 64], sizes = [8, 32], strides = [1, 1]} : vector<8x128xf32> to vector<8x32xf32>
    %111 = vector.extract_strided_slice %107 {offsets = [0, 96], sizes = [8, 32], strides = [1, 1]} : vector<8x128xf32> to vector<8x32xf32>
    %112 = arith.mulf %109, %98 : vector<8x32xf32>
    %113 = arith.mulf %108, %110 : vector<8x32xf32>
    %114 = arith.addf %112, %113 : vector<8x32xf32>
    %115 = math.tanh %114 : vector<8x32xf32>
    %116 = arith.mulf %111, %115 : vector<8x32xf32>
    %117 = vector.extract_strided_slice %5 {offsets = [48, 0], sizes = [8, 128], strides = [1, 1]} : vector<64x128xf32> to vector<8x128xf32>
    %cst_19 = arith.constant dense<0.000000e+00> : vector<8x128xf32>
    %118 = tpu.matmul %116, %6, %cst_19 {dimension_numbers = #tpu.dot_dimension_numbers<[1], [0], [0], [1], [0, 0, 1, 1], [], []>} : vector<8x32xf32>, vector<32x128xf32>, vector<8x128xf32> -> vector<8x128xf32>
    %119 = arith.addf %117, %118 : vector<8x128xf32>
    %120 = arith.mulf %119, %15 : vector<8x128xf32>
    %121 = math.tanh %120 : vector<8x128xf32>
    %122 = arith.mulf %121, %15 : vector<8x128xf32>
    %123 = arith.addf %122, %18 : vector<8x128xf32>
    %124 = vector.extract_strided_slice %123 {offsets = [0, 0], sizes = [8, 32], strides = [1, 1]} : vector<8x128xf32> to vector<8x32xf32>
    %125 = vector.extract_strided_slice %123 {offsets = [0, 32], sizes = [8, 32], strides = [1, 1]} : vector<8x128xf32> to vector<8x32xf32>
    %126 = vector.extract_strided_slice %123 {offsets = [0, 64], sizes = [8, 32], strides = [1, 1]} : vector<8x128xf32> to vector<8x32xf32>
    %127 = vector.extract_strided_slice %123 {offsets = [0, 96], sizes = [8, 32], strides = [1, 1]} : vector<8x128xf32> to vector<8x32xf32>
    %128 = arith.mulf %125, %114 : vector<8x32xf32>
    %129 = arith.mulf %124, %126 : vector<8x32xf32>
    %130 = arith.addf %128, %129 : vector<8x32xf32>
    %131 = math.tanh %130 : vector<8x32xf32>
    %132 = arith.mulf %127, %131 : vector<8x32xf32>
    %133 = vector.extract_strided_slice %5 {offsets = [56, 0], sizes = [8, 128], strides = [1, 1]} : vector<64x128xf32> to vector<8x128xf32>
    %cst_20 = arith.constant dense<0.000000e+00> : vector<8x128xf32>
    %134 = tpu.matmul %132, %6, %cst_20 {dimension_numbers = #tpu.dot_dimension_numbers<[1], [0], [0], [1], [0, 0, 1, 1], [], []>} : vector<8x32xf32>, vector<32x128xf32>, vector<8x128xf32> -> vector<8x128xf32>
    %135 = arith.addf %133, %134 : vector<8x128xf32>
    %136 = arith.mulf %135, %15 : vector<8x128xf32>
    %137 = math.tanh %136 : vector<8x128xf32>
    %138 = arith.mulf %137, %15 : vector<8x128xf32>
    %139 = arith.addf %138, %18 : vector<8x128xf32>
    %140 = vector.extract_strided_slice %139 {offsets = [0, 0], sizes = [8, 32], strides = [1, 1]} : vector<8x128xf32> to vector<8x32xf32>
    %141 = vector.extract_strided_slice %139 {offsets = [0, 32], sizes = [8, 32], strides = [1, 1]} : vector<8x128xf32> to vector<8x32xf32>
    %142 = vector.extract_strided_slice %139 {offsets = [0, 64], sizes = [8, 32], strides = [1, 1]} : vector<8x128xf32> to vector<8x32xf32>
    %143 = vector.extract_strided_slice %139 {offsets = [0, 96], sizes = [8, 32], strides = [1, 1]} : vector<8x128xf32> to vector<8x32xf32>
    %144 = arith.mulf %141, %130 : vector<8x32xf32>
    %145 = arith.mulf %140, %142 : vector<8x32xf32>
    %146 = arith.addf %144, %145 : vector<8x32xf32>
    %147 = math.tanh %146 : vector<8x32xf32>
    %148 = arith.mulf %143, %147 : vector<8x32xf32>
    %c0_21 = arith.constant 0 : index
    %c0_22 = arith.constant 0 : index
    %149 = vector.load %arg4[%c0_21, %c0_22] : memref<8x32xf32, #tpu.memory_space<vmem>>, vector<8x32xf32>
    tpu.vector_store %arg4[%c0_21, %c0_22], %148 {strides = array<i32>} : memref<8x32xf32, #tpu.memory_space<vmem>>, vector<8x32xf32>,
    return
  }
}

</mosaic_0001>

<llo_original>
// kernel: tpu_custom_call.1
$region0: #{tpu_custom_call.1}
  #allocation0 [shape = 'u32[]', space=smem, size = 0x4, offset = 0x4, fixed_abs, tag = 'smem constant byte address 0x4 - core index']
  #allocation1 [shape = 'u32[144,128]{1,0:T(1,128)}', space=vmem, size = 0x12000, scoped, tag = 'internal scratch']
  %s0 = inlined_call_operand.vmem [shape: f32[64,4], index: 0, kind: input, shape index: {}]
  %s1 = inlined_call_operand.vmem [shape: f32[4,128], index: 1, kind: input, shape index: {}]
  %s2 = inlined_call_operand.vmem [shape: f32[32,128], index: 2, kind: input, shape index: {}]
  %s3 = inlined_call_operand.vmem [shape: f32[1,128], index: 3, kind: input, shape index: {}]
  %s4 = inlined_call_operand.hbm [shape: f32[8,32], index: 4, kind: output, shape index: {}]
  %s5 = sld [smem:[#allocation0]]
  $region26: #{tpu_custom_call.1} parent=0
    _
  %s7 = ssub.s32 1, %s5
  %s8 = scalar_select 0, %s7, %s5
  $region1: #{tpu_custom_call.1} parent=0
    #allocation2 [shape = 'u8[4096]{0}', space=vmem, size = 0x1000, scoped, tag = 'output window, operand 0, single buffered']
    #allocation3 [shape = 's32[1]{0}', space=sflag, size = 0x4, scoped, tag = 'scoped memory for tpu_custom_call.1']
    %9 = vsyncpa [#allocation3], 0
    // Predicated region
    $region2: #{tpu_custom_call.1} parent=1 // pred_check
      _
    $region3: #{tpu_custom_call.1} parent=1 // pred_check_branch
      %11 = sbr.rel (0) target = $region5
    $region4: #{tpu_custom_call.1} parent=1 // pred_region
      _
    $region5: #{tpu_custom_call.1} parent=1 // pred_fallthru
      _
    // Predicated region
    $region6: #{tpu_custom_call.1} parent=1 // pred_check
      _
    $region7: #{tpu_custom_call.1} parent=1 // pred_check_branch
      %13 = sbr.rel (0) target = $region9
    $region8: #{tpu_custom_call.1} parent=1 // pred_region
      _
    $region9: #{tpu_custom_call.1} parent=1 // pred_fallthru
      _
    // Predicated region
    $region10: #{tpu_custom_call.1} parent=1 // pred_check
      _
    $region11: #{tpu_custom_call.1} parent=1 // pred_check_branch
      %15 = sbr.rel (0) target = $region13
    $region12: #{tpu_custom_call.1} parent=1 // pred_region
      _
    $region13: #{tpu_custom_call.1} parent=1 // pred_fallthru
      _
    // Predicated region
    $region14: #{tpu_custom_call.1} parent=1 // pred_check
      _
    $region15: #{tpu_custom_call.1} parent=1 // pred_check_branch
      %17 = sbr.rel (0) target = $region17
    $region16: #{tpu_custom_call.1} parent=1 // pred_region
      _
    $region17: #{tpu_custom_call.1} parent=1 // pred_fallthru
      _
    %v18 = vld [vmem:[%s0] sm:$0xff]
    %v19 = vld [vmem:[%s0 + $0x8] sm:$0xff]
    %v20 = vld [vmem:[%s0 + $0x10] sm:$0xff]
    %v21 = vld [vmem:[%s0 + $0x18] sm:$0xff]
    %v22 = vld [vmem:[%s0 + $0x20] sm:$0xff]
    %v23 = vld [vmem:[%s0 + $0x28] sm:$0xff]
    %v24 = vld [vmem:[%s0 + $0x30] sm:$0xff]
    %v25 = vld [vmem:[%s0 + $0x38] sm:$0xff]
    %v26 = vld [vmem:[%s1] sm:$0xf]
    %v27 = vld [vmem:[%s3] sm:$0x1]
    %v29 = vlaneseq
    %v30 = vshrl.u32 %v29, 7
    %v31 = vsub.s32 0, %v30
    %v32 = vrot.slane %v27, %v31
    %vm34 = vcmask 31744
    %v36 = vsel %vm34, %v18, 0
    %v39 = vsel %vm34, %v19, 0
    %v42 = vsel %vm34, %v20, 0
    %v45 = vsel %vm34, %v21, 0
    %v48 = vsel %vm34, %v22, 0
    %v51 = vsel %vm34, %v23, 0
    %v54 = vsel %vm34, %v24, 0
    %v57 = vsel %vm34, %v25, 0
    %vm59 = vcmask 1043456
    %v61 = vsel %vm59, %v26, 0
    %63 = vmatprep.subr.mxu0 0.0
    %64 = vmatpush1.msra.mxu0 %v61
    %65 = vmatprep.subr.mxu0 0.0
    %66 = vmatpush1.msra.mxu0 0.0
    %67 = vmatprep.subr.mxu0 0.0
    %68 = vmatpush1.msra.mxu0 0.0
    %69 = vmatprep.subr.mxu0 0.0
    %70 = vmatpush1.msra.mxu0 0.0
    %71 = vmatprep.subr.mxu0 0.0
    %72 = vmatpush1.msra.mxu0 0.0
    %73 = vmatprep.subr.mxu0 0.0
    %74 = vmatpush1.msra.mxu0 0.0
    %75 = vmatprep.subr.mxu0 0.0
    %76 = vmatpush1.msra.mxu0 0.0
    %77 = vmatprep.subr.mxu0 0.0
    %78 = vmatpush1.msra.mxu0 0.0
    %79 = vmatprep.subr.mxu0 0.0
    %80 = vmatpush1.msra.mxu0 0.0
    %81 = vmatprep.subr.mxu0 0.0
    %82 = vmatpush1.msra.mxu0 0.0
    %83 = vmatprep.subr.mxu0 0.0
    %84 = vmatpush1.msra.mxu0 0.0
    %85 = vmatprep.subr.mxu0 0.0
    %86 = vmatpush1.msra.mxu0 0.0
    %87 = vmatprep.subr.mxu0 0.0
    %88 = vmatpush1.msra.mxu0 0.0
    %89 = vmatprep.subr.mxu0 0.0
    %90 = vmatpush1.msra.mxu0 0.0
    %91 = vmatprep.subr.mxu0 0.0
    %92 = vmatpush1.msra.mxu0 0.0
    %93 = vmatprep.subr.mxu0 0.0
    %94 = vmatpush1.msra.mxu0 0.0
    %95 = vmatprep.subr.mxu0 0.0
    %96 = vmatpush1.msra.mxu0 0.0
    %97 = vmatprep.subr.mxu0 0.0
    %98 = vmatpush1.msra.mxu0 0.0
    %99 = vmatprep.subr.mxu0 0.0
    %100 = vmatpush1.msra.mxu0 0.0
    %101 = vmatprep.subr.mxu0 0.0
    %102 = vmatpush1.msra.mxu0 0.0
    %103 = vmatprep.subr.mxu0 0.0
    %104 = vmatpush1.msra.mxu0 0.0
    %105 = vmatprep.subr.mxu0 0.0
    %106 = vmatpush1.msra.mxu0 0.0
    %107 = vmatprep.subr.mxu0 0.0
    %108 = vmatpush1.msra.mxu0 0.0
    %109 = vmatprep.subr.mxu0 0.0
    %110 = vmatpush1.msra.mxu0 0.0
    %111 = vmatprep.subr.mxu0 0.0
    %112 = vmatpush1.msra.mxu0 0.0
    %113 = vmatprep.subr.mxu0 0.0
    %114 = vmatpush1.msra.mxu0 0.0
    %115 = vmatprep.subr.mxu0 0.0
    %116 = vmatpush1.msra.mxu0 0.0
    %117 = vmatprep.subr.mxu0 0.0
    %118 = vmatpush1.msra.mxu0 0.0
    %119 = vmatprep.subr.mxu0 0.0
    %120 = vmatpush1.msra.mxu0 0.0
    %121 = vmatprep.subr.mxu0 0.0
    %122 = vmatpush1.msra.mxu0 0.0
    %123 = vmatprep.subr.mxu0 0.0
    %124 = vmatpush1.msra.mxu0 0.0
    %125 = vmatprep.subr.mxu0 0.0
    %126 = vmatpush1.msra.mxu0 0.0
    %127 = vmatprep.mubr.f32.mxu0 0.0
    %128 = vmatmul.mubr.f32.gmra.mrb[0].mxu0 %v36
    %v129 = vpop.f32.mrb[0].mxu0
    %v130 = vadd.f32 %v32, %v129
    %v131 = vpop.f32.mrb[0].mxu0
    %132 = vmatprep.mubr.f32.mxu0 0.0
    %133 = vmatmul.mubr.f32.gmra.mrb[0].mxu0 %v39
    %v134 = vpop.f32.mrb[0].mxu0
    %v135 = vadd.f32 %v32, %v134
    %v136 = vpop.f32.mrb[0].mxu0
    %137 = vmatprep.mubr.f32.mxu0 0.0
    %138 = vmatmul.mubr.f32.gmra.mrb[0].mxu0 %v42
    %v139 = vpop.f32.mrb[0].mxu0
    %v140 = vadd.f32 %v32, %v139
    %v141 = vpop.f32.mrb[0].mxu0
    %142 = vmatprep.mubr.f32.mxu0 0.0
    %143 = vmatmul.mubr.f32.gmra.mrb[0].mxu0 %v45
    %v144 = vpop.f32.mrb[0].mxu0
    %v145 = vadd.f32 %v32, %v144
    %v146 = vpop.f32.mrb[0].mxu0
    %147 = vmatprep.mubr.f32.mxu0 0.0
    %148 = vmatmul.mubr.f32.gmra.mrb[0].mxu0 %v48
    %v149 = vpop.f32.mrb[0].mxu0
    %v150 = vadd.f32 %v32, %v149
    %v151 = vpop.f32.mrb[0].mxu0
    %152 = vmatprep.mubr.f32.mxu0 0.0
    %153 = vmatmul.mubr.f32.gmra.mrb[0].mxu0 %v51
    %v154 = vpop.f32.mrb[0].mxu0
    %v155 = vadd.f32 %v32, %v154
    %v156 = vpop.f32.mrb[0].mxu0
    %157 = vmatprep.mubr.f32.mxu0 0.0
    %158 = vmatmul.mubr.f32.gmra.mrb[0].mxu0 %v54
    %v159 = vpop.f32.mrb[0].mxu0
    %v160 = vadd.f32 %v32, %v159
    %v161 = vpop.f32.mrb[0].mxu0
    %162 = vmatprep.mubr.f32.mxu0 0.0
    %163 = vmatmul.mubr.f32.gmra.mrb[0].mxu0 %v57
    %v164 = vpop.f32.mrb[0].mxu0
    %v165 = vadd.f32 %v32, %v164
    %v166 = vpop.f32.mrb[0].mxu0
    %167 = vdwg.mxu0
    %v168 = vld [vmem:[%s2] sm:$0xff]
    %v169 = vld [vmem:[%s2 + $0x8] sm:$0xff]
    %v170 = vld [vmem:[%s2 + $0x10] sm:$0xff]
    %v171 = vld [vmem:[%s2 + $0x18] sm:$0xff]
    %v172 = vlaneseq
    %v173 = vand.u32 %v172, 127
    %vm174 = vcmp.ge.s32.totalorder %v173, 64
    %vm175 = vcmp.lt.s32.totalorder %v173, 96
    %vm176 = vmand %vm174, %vm175
    %v177 = vsel %vm176, 1.0, 0.5
    %v178 = vsel %vm176, 0.0, 0.5
    %vm179 = vcmask 261120
    %v181 = vsel %vm179, 0.0, 0
    %183 = vmatprep.subr.mxu0 0.0
    %184 = vmatpush1.msra.mxu0 %v168
    %185 = vmatprep.subr.mxu0 0.0
    %186 = vmatpush1.msra.mxu0 %v169
    %187 = vmatprep.subr.mxu0 0.0
    %188 = vmatpush1.msra.mxu0 %v170
    %189 = vmatprep.subr.mxu0 0.0
    %190 = vmatpush1.msra.mxu0 %v171
    %191 = vmatprep.subr.mxu0 0.0
    %192 = vmatpush1.msra.mxu0 0.0
    %193 = vmatprep.subr.mxu0 0.0
    %194 = vmatpush1.msra.mxu0 0.0
    %195 = vmatprep.subr.mxu0 0.0
    %196 = vmatpush1.msra.mxu0 0.0
    %197 = vmatprep.subr.mxu0 0.0
    %198 = vmatpush1.msra.mxu0 0.0
    %199 = vmatprep.subr.mxu0 0.0
    %200 = vmatpush1.msra.mxu0 0.0
    %201 = vmatprep.subr.mxu0 0.0
    %202 = vmatpush1.msra.mxu0 0.0
    %203 = vmatprep.subr.mxu0 0.0
    %204 = vmatpush1.msra.mxu0 0.0
    %205 = vmatprep.subr.mxu0 0.0
    %206 = vmatpush1.msra.mxu0 0.0
    %207 = vmatprep.subr.mxu0 0.0
    %208 = vmatpush1.msra.mxu0 0.0
    %209 = vmatprep.subr.mxu0 0.0
    %210 = vmatpush1.msra.mxu0 0.0
    %211 = vmatprep.subr.mxu0 0.0
    %212 = vmatpush1.msra.mxu0 0.0
    %213 = vmatprep.subr.mxu0 0.0
    %214 = vmatpush1.msra.mxu0 0.0
    %215 = vmatprep.subr.mxu0 0.0
    %216 = vmatpush1.msra.mxu0 0.0
    %217 = vmatprep.subr.mxu0 0.0
    %218 = vmatpush1.msra.mxu0 0.0
    %219 = vmatprep.subr.mxu0 0.0
    %220 = vmatpush1.msra.mxu0 0.0
    %221 = vmatprep.subr.mxu0 0.0
    %222 = vmatpush1.msra.mxu0 0.0
    %223 = vmatprep.subr.mxu0 0.0
    %224 = vmatpush1.msra.mxu0 0.0
    %225 = vmatprep.subr.mxu0 0.0
    %226 = vmatpush1.msra.mxu0 0.0
    %227 = vmatprep.subr.mxu0 0.0
    %228 = vmatpush1.msra.mxu0 0.0
    %229 = vmatprep.subr.mxu0 0.0
    %230 = vmatpush1.msra.mxu0 0.0
    %231 = vmatprep.subr.mxu0 0.0
    %232 = vmatpush1.msra.mxu0 0.0
    %233 = vmatprep.subr.mxu0 0.0
    %234 = vmatpush1.msra.mxu0 0.0
    %235 = vmatprep.subr.mxu0 0.0
    %236 = vmatpush1.msra.mxu0 0.0
    %237 = vmatprep.subr.mxu0 0.0
    %238 = vmatpush1.msra.mxu0 0.0
    %239 = vmatprep.subr.mxu0 0.0
    %240 = vmatpush1.msra.mxu0 0.0
    %241 = vmatprep.subr.mxu0 0.0
    %242 = vmatpush1.msra.mxu0 0.0
    %243 = vmatprep.subr.mxu0 0.0
    %244 = vmatpush1.msra.mxu0 0.0
    %245 = vmatprep.subr.mxu0 0.0
    %246 = vmatpush1.msra.mxu0 0.0
    %247 = vmatprep.mubr.f32.mxu0 0.0
    %248 = vmatmul.mubr.f32.gmra.mrb[0].mxu0 %v181
    %v249 = vpop.f32.mrb[0].mxu0
    %v250 = vadd.f32 0.0, %v249
    %v251 = vpop.f32.mrb[0].mxu0
    %252 = vdwg.mxu0
    %v253 = vadd.f32 %v130, %v250
    %v254 = vmul.f32 %v253, %v177
    %v255 = vtanh.pop %v254
    %v256 = vmul.f32 %v255, %v177
    %v257 = vadd.f32 %v256, %v178
    %v258 = vmul.f32 %v257, 0.0
    %260 = vrot.lane.b32.xlu0 %v257, 64
    %v261 = vpop.permute.xlu0 %260
    %v263 = vmul.f32 %v257, %v261
    %265 = vrot.lane.b32.xlu0 %v263, 32
    %v266 = vpop.permute.xlu0 %265
    %v268 = vadd.f32 %v258, %v266
    %v269 = vtanh.pop %v268
    %271 = vrot.lane.b32.xlu0 %v269, 64
    %v272 = vpop.permute.xlu0 %271
    %v274 = vmul.f32 %v257, %v272
    %276 = vrot.lane.b32.xlu0 %v274, 32
    %v277 = vpop.permute.xlu0 %276
    %v278 = vsel %vm179, %v277, 0
    %280 = vmatprep.subr.mxu0 0.0
    %281 = vmatpush1.msra.mxu0 %v168
    %282 = vmatprep.subr.mxu0 0.0
    %283 = vmatpush1.msra.mxu0 %v169
    %284 = vmatprep.subr.mxu0 0.0
    %285 = vmatpush1.msra.mxu0 %v170
    %286 = vmatprep.subr.mxu0 0.0
    %287 = vmatpush1.msra.mxu0 %v171
    %288 = vmatprep.subr.mxu0 0.0
    %289 = vmatpush1.msra.mxu0 0.0
    %290 = vmatprep.subr.mxu0 0.0
    %291 = vmatpush1.msra.mxu0 0.0
    %292 = vmatprep.subr.mxu0 0.0
    %293 = vmatpush1.msra.mxu0 0.0
    %294 = vmatprep.subr.mxu0 0.0
    %295 = vmatpush1.msra.mxu0 0.0
    %296 = vmatprep.subr.mxu0 0.0
    %297 = vmatpush1.msra.mxu0 0.0
    %298 = vmatprep.subr.mxu0 0.0
    %299 = vmatpush1.msra.mxu0 0.0
    %300 = vmatprep.subr.mxu0 0.0
    %301 = vmatpush1.msra.mxu0 0.0
    %302 = vmatprep.subr.mxu0 0.0
    %303 = vmatpush1.msra.mxu0 0.0
    %304 = vmatprep.subr.mxu0 0.0
    %305 = vmatpush1.msra.mxu0 0.0
    %306 = vmatprep.subr.mxu0 0.0
    %307 = vmatpush1.msra.mxu0 0.0
    %308 = vmatprep.subr.mxu0 0.0
    %309 = vmatpush1.msra.mxu0 0.0
    %310 = vmatprep.subr.mxu0 0.0
    %311 = vmatpush1.msra.mxu0 0.0
    %312 = vmatprep.subr.mxu0 0.0
    %313 = vmatpush1.msra.mxu0 0.0
    %314 = vmatprep.subr.mxu0 0.0
    %315 = vmatpush1.msra.mxu0 0.0
    %316 = vmatprep.subr.mxu0 0.0
    %317 = vmatpush1.msra.mxu0 0.0
    %318 = vmatprep.subr.mxu0 0.0
    %319 = vmatpush1.msra.mxu0 0.0
    %320 = vmatprep.subr.mxu0 0.0
    %321 = vmatpush1.msra.mxu0 0.0
    %322 = vmatprep.subr.mxu0 0.0
    %323 = vmatpush1.msra.mxu0 0.0
    %324 = vmatprep.subr.mxu0 0.0
    %325 = vmatpush1.msra.mxu0 0.0
    %326 = vmatprep.subr.mxu0 0.0
    %327 = vmatpush1.msra.mxu0 0.0
    %328 = vmatprep.subr.mxu0 0.0
    %329 = vmatpush1.msra.mxu0 0.0
    %330 = vmatprep.subr.mxu0 0.0
    %331 = vmatpush1.msra.mxu0 0.0
    %332 = vmatprep.subr.mxu0 0.0
    %333 = vmatpush1.msra.mxu0 0.0
    %334 = vmatprep.subr.mxu0 0.0
    %335 = vmatpush1.msra.mxu0 0.0
    %336 = vmatprep.subr.mxu0 0.0
    %337 = vmatpush1.msra.mxu0 0.0
    %338 = vmatprep.subr.mxu0 0.0
    %339 = vmatpush1.msra.mxu0 0.0
    %340 = vmatprep.subr.mxu0 0.0
    %341 = vmatpush1.msra.mxu0 0.0
    %342 = vmatprep.subr.mxu0 0.0
    %343 = vmatpush1.msra.mxu0 0.0
    %344 = vmatprep.mubr.f32.mxu0 0.0
    %345 = vmatmul.mubr.f32.gmra.mrb[0].mxu0 %v278
    %v346 = vpop.f32.mrb[0].mxu0
    %v347 = vadd.f32 0.0, %v346
    %v348 = vpop.f32.mrb[0].mxu0
    %349 = vdwg.mxu0
    %v350 = vadd.f32 %v135, %v347
    %v351 = vmul.f32 %v350, %v177
    %v352 = vtanh.pop %v351
    %v353 = vmul.f32 %v352, %v177
    %v354 = vadd.f32 %v353, %v178
    %v355 = vmul.f32 %v354, %v268
    %357 = vrot.lane.b32.xlu0 %v354, 64
    %v358 = vpop.permute.xlu0 %357
    %v360 = vmul.f32 %v354, %v358
    %362 = vrot.lane.b32.xlu0 %v360, 32
    %v363 = vpop.permute.xlu0 %362
    %v365 = vadd.f32 %v355, %v363
    %v366 = vtanh.pop %v365
    %368 = vrot.lane.b32.xlu0 %v366, 64
    %v369 = vpop.permute.xlu0 %368
    %v371 = vmul.f32 %v354, %v369
    %373 = vrot.lane.b32.xlu0 %v371, 32
    %v374 = vpop.permute.xlu0 %373
    %v375 = vsel %vm179, %v374, 0
    %377 = vmatprep.subr.mxu0 0.0
    %378 = vmatpush1.msra.mxu0 %v168
    %379 = vmatprep.subr.mxu0 0.0
    %380 = vmatpush1.msra.mxu0 %v169
    %381 = vmatprep.subr.mxu0 0.0
    %382 = vmatpush1.msra.mxu0 %v170
    %383 = vmatprep.subr.mxu0 0.0
    %384 = vmatpush1.msra.mxu0 %v171
    %385 = vmatprep.subr.mxu0 0.0
    %386 = vmatpush1.msra.mxu0 0.0
    %387 = vmatprep.subr.mxu0 0.0
    %388 = vmatpush1.msra.mxu0 0.0
    %389 = vmatprep.subr.mxu0 0.0
    %390 = vmatpush1.msra.mxu0 0.0
    %391 = vmatprep.subr.mxu0 0.0
    %392 = vmatpush1.msra.mxu0 0.0
    %393 = vmatprep.subr.mxu0 0.0
    %394 = vmatpush1.msra.mxu0 0.0
    %395 = vmatprep.subr.mxu0 0.0
    %396 = vmatpush1.msra.mxu0 0.0
    %397 = vmatprep.subr.mxu0 0.0
    %398 = vmatpush1.msra.mxu0 0.0
    %399 = vmatprep.subr.mxu0 0.0
    %400 = vmatpush1.msra.mxu0 0.0
    %401 = vmatprep.subr.mxu0 0.0
    %402 = vmatpush1.msra.mxu0 0.0
    %403 = vmatprep.subr.mxu0 0.0
    %404 = vmatpush1.msra.mxu0 0.0
    %405 = vmatprep.subr.mxu0 0.0
    %406 = vmatpush1.msra.mxu0 0.0
    %407 = vmatprep.subr.mxu0 0.0
    %408 = vmatpush1.msra.mxu0 0.0
    %409 = vmatprep.subr.mxu0 0.0
    %410 = vmatpush1.msra.mxu0 0.0
    %411 = vmatprep.subr.mxu0 0.0
    %412 = vmatpush1.msra.mxu0 0.0
    %413 = vmatprep.subr.mxu0 0.0
    %414 = vmatpush1.msra.mxu0 0.0
    %415 = vmatprep.subr.mxu0 0.0
    %416 = vmatpush1.msra.mxu0 0.0
    %417 = vmatprep.subr.mxu0 0.0
    %418 = vmatpush1.msra.mxu0 0.0
    %419 = vmatprep.subr.mxu0 0.0
    %420 = vmatpush1.msra.mxu0 0.0
    %421 = vmatprep.subr.mxu0 0.0
    %422 = vmatpush1.msra.mxu0 0.0
    %423 = vmatprep.subr.mxu0 0.0
    %424 = vmatpush1.msra.mxu0 0.0
    %425 = vmatprep.subr.mxu0 0.0
    %426 = vmatpush1.msra.mxu0 0.0
    %427 = vmatprep.subr.mxu0 0.0
    %428 = vmatpush1.msra.mxu0 0.0
    %429 = vmatprep.subr.mxu0 0.0
    %430 = vmatpush1.msra.mxu0 0.0
    %431 = vmatprep.subr.mxu0 0.0
    %432 = vmatpush1.msra.mxu0 0.0
    %433 = vmatprep.subr.mxu0 0.0
    %434 = vmatpush1.msra.mxu0 0.0
    %435 = vmatprep.subr.mxu0 0.0
    %436 = vmatpush1.msra.mxu0 0.0
    %437 = vmatprep.subr.mxu0 0.0
    %438 = vmatpush1.msra.mxu0 0.0
    %439 = vmatprep.subr.mxu0 0.0
    %440 = vmatpush1.msra.mxu0 0.0
    %441 = vmatprep.mubr.f32.mxu0 0.0
    %442 = vmatmul.mubr.f32.gmra.mrb[0].mxu0 %v375
    %v443 = vpop.f32.mrb[0].mxu0
    %v444 = vadd.f32 0.0, %v443
    %v445 = vpop.f32.mrb[0].mxu0
    %446 = vdwg.mxu0
    %v447 = vadd.f32 %v140, %v444
    %v448 = vmul.f32 %v447, %v177
    %v449 = vtanh.pop %v448
    %v450 = vmul.f32 %v449, %v177
    %v451 = vadd.f32 %v450, %v178
    %v452 = vmul.f32 %v451, %v365
    %454 = vrot.lane.b32.xlu0 %v451, 64
    %v455 = vpop.permute.xlu0 %454
    %v457 = vmul.f32 %v451, %v455
    %459 = vrot.lane.b32.xlu0 %v457, 32
    %v460 = vpop.permute.xlu0 %459
    %v462 = vadd.f32 %v452, %v460
    %v463 = vtanh.pop %v462
    %465 = vrot.lane.b32.xlu0 %v463, 64
    %v466 = vpop.permute.xlu0 %465
    %v468 = vmul.f32 %v451, %v466
    %470 = vrot.lane.b32.xlu0 %v468, 32
    %v471 = vpop.permute.xlu0 %470
    %v472 = vsel %vm179, %v471, 0
    %474 = vmatprep.subr.mxu0 0.0
    %475 = vmatpush1.msra.mxu0 %v168
    %476 = vmatprep.subr.mxu0 0.0
    %477 = vmatpush1.msra.mxu0 %v169
    %478 = vmatprep.subr.mxu0 0.0
    %479 = vmatpush1.msra.mxu0 %v170
    %480 = vmatprep.subr.mxu0 0.0
    %481 = vmatpush1.msra.mxu0 %v171
    %482 = vmatprep.subr.mxu0 0.0
    %483 = vmatpush1.msra.mxu0 0.0
    %484 = vmatprep.subr.mxu0 0.0
    %485 = vmatpush1.msra.mxu0 0.0
    %486 = vmatprep.subr.mxu0 0.0
    %487 = vmatpush1.msra.mxu0 0.0
    %488 = vmatprep.subr.mxu0 0.0
    %489 = vmatpush1.msra.mxu0 0.0
    %490 = vmatprep.subr.mxu0 0.0
    %491 = vmatpush1.msra.mxu0 0.0
    %492 = vmatprep.subr.mxu0 0.0
    %493 = vmatpush1.msra.mxu0 0.0
    %494 = vmatprep.subr.mxu0 0.0
    %495 = vmatpush1.msra.mxu0 0.0
    %496 = vmatprep.subr.mxu0 0.0
    %497 = vmatpush1.msra.mxu0 0.0
    %498 = vmatprep.subr.mxu0 0.0
    %499 = vmatpush1.msra.mxu0 0.0
    %500 = vmatprep.subr.mxu0 0.0
    %501 = vmatpush1.msra.mxu0 0.0
    %502 = vmatprep.subr.mxu0 0.0
    %503 = vmatpush1.msra.mxu0 0.0
    %504 = vmatprep.subr.mxu0 0.0
    %505 = vmatpush1.msra.mxu0 0.0
    %506 = vmatprep.subr.mxu0 0.0
    %507 = vmatpush1.msra.mxu0 0.0
    %508 = vmatprep.subr.mxu0 0.0
    %509 = vmatpush1.msra.mxu0 0.0
    %510 = vmatprep.subr.mxu0 0.0
    %511 = vmatpush1.msra.mxu0 0.0
    %512 = vmatprep.subr.mxu0 0.0
    %513 = vmatpush1.msra.mxu0 0.0
    %514 = vmatprep.subr.mxu0 0.0
    %515 = vmatpush1.msra.mxu0 0.0
    %516 = vmatprep.subr.mxu0 0.0
    %517 = vmatpush1.msra.mxu0 0.0
    %518 = vmatprep.subr.mxu0 0.0
    %519 = vmatpush1.msra.mxu0 0.0
    %520 = vmatprep.subr.mxu0 0.0
    %521 = vmatpush1.msra.mxu0 0.0
    %522 = vmatprep.subr.mxu0 0.0
    %523 = vmatpush1.msra.mxu0 0.0
    %524 = vmatprep.subr.mxu0 0.0
    %525 = vmatpush1.msra.mxu0 0.0
    %526 = vmatprep.subr.mxu0 0.0
    %527 = vmatpush1.msra.mxu0 0.0
    %528 = vmatprep.subr.mxu0 0.0
    %529 = vmatpush1.msra.mxu0 0.0
    %530 = vmatprep.subr.mxu0 0.0
    %531 = vmatpush1.msra.mxu0 0.0
    %532 = vmatprep.subr.mxu0 0.0
    %533 = vmatpush1.msra.mxu0 0.0
    %534 = vmatprep.subr.mxu0 0.0
    %535 = vmatpush1.msra.mxu0 0.0
    %536 = vmatprep.subr.mxu0 0.0
    %537 = vmatpush1.msra.mxu0 0.0
    %538 = vmatprep.mubr.f32.mxu0 0.0
    %539 = vmatmul.mubr.f32.gmra.mrb[0].mxu0 %v472
    %v540 = vpop.f32.mrb[0].mxu0
    %v541 = vadd.f32 0.0, %v540
    %v542 = vpop.f32.mrb[0].mxu0
    %543 = vdwg.mxu0
    %v544 = vadd.f32 %v145, %v541
    %v545 = vmul.f32 %v544, %v177
    %v546 = vtanh.pop %v545
    %v547 = vmul.f32 %v546, %v177
    %v548 = vadd.f32 %v547, %v178
    %v549 = vmul.f32 %v548, %v462
    %551 = vrot.lane.b32.xlu0 %v548, 64
    %v552 = vpop.permute.xlu0 %551
    %v554 = vmul.f32 %v548, %v552
    %556 = vrot.lane.b32.xlu0 %v554, 32
    %v557 = vpop.permute.xlu0 %556
    %v559 = vadd.f32 %v549, %v557
    %v560 = vtanh.pop %v559
    %562 = vrot.lane.b32.xlu0 %v560, 64
    %v563 = vpop.permute.xlu0 %562
    %v565 = vmul.f32 %v548, %v563
    %567 = vrot.lane.b32.xlu0 %v565, 32
    %v568 = vpop.permute.xlu0 %567
    %v569 = vsel %vm179, %v568, 0
    %571 = vmatprep.subr.mxu0 0.0
    %572 = vmatpush1.msra.mxu0 %v168
    %573 = vmatprep.subr.mxu0 0.0
    %574 = vmatpush1.msra.mxu0 %v169
    %575 = vmatprep.subr.mxu0 0.0
    %576 = vmatpush1.msra.mxu0 %v170
    %577 = vmatprep.subr.mxu0 0.0
    %578 = vmatpush1.msra.mxu0 %v171
    %579 = vmatprep.subr.mxu0 0.0
    %580 = vmatpush1.msra.mxu0 0.0
    %581 = vmatprep.subr.mxu0 0.0
    %582 = vmatpush1.msra.mxu0 0.0
    %583 = vmatprep.subr.mxu0 0.0
    %584 = vmatpush1.msra.mxu0 0.0
    %585 = vmatprep.subr.mxu0 0.0
    %586 = vmatpush1.msra.mxu0 0.0
    %587 = vmatprep.subr.mxu0 0.0
    %588 = vmatpush1.msra.mxu0 0.0
    %589 = vmatprep.subr.mxu0 0.0
    %590 = vmatpush1.msra.mxu0 0.0
    %591 = vmatprep.subr.mxu0 0.0
    %592 = vmatpush1.msra.mxu0 0.0
    %593 = vmatprep.subr.mxu0 0.0
    %594 = vmatpush1.msra.mxu0 0.0
    %595 = vmatprep.subr.mxu0 0.0
    %596 = vmatpush1.msra.mxu0 0.0
    %597 = vmatprep.subr.mxu0 0.0
    %598 = vmatpush1.msra.mxu0 0.0
    %599 = vmatprep.subr.mxu0 0.0
    %600 = vmatpush1.msra.mxu0 0.0
    %601 = vmatprep.subr.mxu0 0.0
    %602 = vmatpush1.msra.mxu0 0.0
    %603 = vmatprep.subr.mxu0 0.0
    %604 = vmatpush1.msra.mxu0 0.0
    %605 = vmatprep.subr.mxu0 0.0
    %606 = vmatpush1.msra.mxu0 0.0
    %607 = vmatprep.subr.mxu0 0.0
    %608 = vmatpush1.msra.mxu0 0.0
    %609 = vmatprep.subr.mxu0 0.0
    %610 = vmatpush1.msra.mxu0 0.0
    %611 = vmatprep.subr.mxu0 0.0
    %612 = vmatpush1.msra.mxu0 0.0
    %613 = vmatprep.subr.mxu0 0.0
    %614 = vmatpush1.msra.mxu0 0.0
    %615 = vmatprep.subr.mxu0 0.0
    %616 = vmatpush1.msra.mxu0 0.0
    %617 = vmatprep.subr.mxu0 0.0
    %618 = vmatpush1.msra.mxu0 0.0
    %619 = vmatprep.subr.mxu0 0.0
    %620 = vmatpush1.msra.mxu0 0.0
    %621 = vmatprep.subr.mxu0 0.0
    %622 = vmatpush1.msra.mxu0 0.0
    %623 = vmatprep.subr.mxu0 0.0
    %624 = vmatpush1.msra.mxu0 0.0
    %625 = vmatprep.subr.mxu0 0.0
    %626 = vmatpush1.msra.mxu0 0.0
    %627 = vmatprep.subr.mxu0 0.0
    %628 = vmatpush1.msra.mxu0 0.0
    %629 = vmatprep.subr.mxu0 0.0
    %630 = vmatpush1.msra.mxu0 0.0
    %631 = vmatprep.subr.mxu0 0.0
    %632 = vmatpush1.msra.mxu0 0.0
    %633 = vmatprep.subr.mxu0 0.0
    %634 = vmatpush1.msra.mxu0 0.0
    %635 = vmatprep.mubr.f32.mxu0 0.0
    %636 = vmatmul.mubr.f32.gmra.mrb[0].mxu0 %v569
    %v637 = vpop.f32.mrb[0].mxu0
    %v638 = vadd.f32 0.0, %v637
    %v639 = vpop.f32.mrb[0].mxu0
    %640 = vdwg.mxu0
    %v641 = vadd.f32 %v150, %v638
    %v642 = vmul.f32 %v641, %v177
    %v643 = vtanh.pop %v642
    %v644 = vmul.f32 %v643, %v177
    %v645 = vadd.f32 %v644, %v178
    %v646 = vmul.f32 %v645, %v559
    %648 = vrot.lane.b32.xlu0 %v645, 64
    %v649 = vpop.permute.xlu0 %648
    %v651 = vmul.f32 %v645, %v649
    %653 = vrot.lane.b32.xlu0 %v651, 32
    %v654 = vpop.permute.xlu0 %653
    %v656 = vadd.f32 %v646, %v654
    %v657 = vtanh.pop %v656
    %659 = vrot.lane.b32.xlu0 %v657, 64
    %v660 = vpop.permute.xlu0 %659
    %v662 = vmul.f32 %v645, %v660
    %664 = vrot.lane.b32.xlu0 %v662, 32
    %v665 = vpop.permute.xlu0 %664
    %v666 = vsel %vm179, %v665, 0
    %668 = vmatprep.subr.mxu0 0.0
    %669 = vmatpush1.msra.mxu0 %v168
    %670 = vmatprep.subr.mxu0 0.0
    %671 = vmatpush1.msra.mxu0 %v169
    %672 = vmatprep.subr.mxu0 0.0
    %673 = vmatpush1.msra.mxu0 %v170
    %674 = vmatprep.subr.mxu0 0.0
    %675 = vmatpush1.msra.mxu0 %v171
    %676 = vmatprep.subr.mxu0 0.0
    %677 = vmatpush1.msra.mxu0 0.0
    %678 = vmatprep.subr.mxu0 0.0
    %679 = vmatpush1.msra.mxu0 0.0
    %680 = vmatprep.subr.mxu0 0.0
    %681 = vmatpush1.msra.mxu0 0.0
    %682 = vmatprep.subr.mxu0 0.0
    %683 = vmatpush1.msra.mxu0 0.0
    %684 = vmatprep.subr.mxu0 0.0
    %685 = vmatpush1.msra.mxu0 0.0
    %686 = vmatprep.subr.mxu0 0.0
    %687 = vmatpush1.msra.mxu0 0.0
    %688 = vmatprep.subr.mxu0 0.0
    %689 = vmatpush1.msra.mxu0 0.0
    %690 = vmatprep.subr.mxu0 0.0
    %691 = vmatpush1.msra.mxu0 0.0
    %692 = vmatprep.subr.mxu0 0.0
    %693 = vmatpush1.msra.mxu0 0.0
    %694 = vmatprep.subr.mxu0 0.0
    %695 = vmatpush1.msra.mxu0 0.0
    %696 = vmatprep.subr.mxu0 0.0
    %697 = vmatpush1.msra.mxu0 0.0
    %698 = vmatprep.subr.mxu0 0.0
    %699 = vmatpush1.msra.mxu0 0.0
    %700 = vmatprep.subr.mxu0 0.0
    %701 = vmatpush1.msra.mxu0 0.0
    %702 = vmatprep.subr.mxu0 0.0
    %703 = vmatpush1.msra.mxu0 0.0
    %704 = vmatprep.subr.mxu0 0.0
    %705 = vmatpush1.msra.mxu0 0.0
    %706 = vmatprep.subr.mxu0 0.0
    %707 = vmatpush1.msra.mxu0 0.0
    %708 = vmatprep.subr.mxu0 0.0
    %709 = vmatpush1.msra.mxu0 0.0
    %710 = vmatprep.subr.mxu0 0.0
    %711 = vmatpush1.msra.mxu0 0.0
    %712 = vmatprep.subr.mxu0 0.0
    %713 = vmatpush1.msra.mxu0 0.0
    %714 = vmatprep.subr.mxu0 0.0
    %715 = vmatpush1.msra.mxu0 0.0
    %716 = vmatprep.subr.mxu0 0.0
    %717 = vmatpush1.msra.mxu0 0.0
    %718 = vmatprep.subr.mxu0 0.0
    %719 = vmatpush1.msra.mxu0 0.0
    %720 = vmatprep.subr.mxu0 0.0
    %721 = vmatpush1.msra.mxu0 0.0
    %722 = vmatprep.subr.mxu0 0.0
    %723 = vmatpush1.msra.mxu0 0.0
    %724 = vmatprep.subr.mxu0 0.0
    %725 = vmatpush1.msra.mxu0 0.0
    %726 = vmatprep.subr.mxu0 0.0
    %727 = vmatpush1.msra.mxu0 0.0
    %728 = vmatprep.subr.mxu0 0.0
    %729 = vmatpush1.msra.mxu0 0.0
    %730 = vmatprep.subr.mxu0 0.0
    %731 = vmatpush1.msra.mxu0 0.0
    %732 = vmatprep.mubr.f32.mxu0 0.0
    %733 = vmatmul.mubr.f32.gmra.mrb[0].mxu0 %v666
    %v734 = vpop.f32.mrb[0].mxu0
    %v735 = vadd.f32 0.0, %v734
    %v736 = vpop.f32.mrb[0].mxu0
    %737 = vdwg.mxu0
    %v738 = vadd.f32 %v155, %v735
    %v739 = vmul.f32 %v738, %v177
    %v740 = vtanh.pop %v739
    %v741 = vmul.f32 %v740, %v177
    %v742 = vadd.f32 %v741, %v178
    %v743 = vmul.f32 %v742, %v656
    %745 = vrot.lane.b32.xlu0 %v742, 64
    %v746 = vpop.permute.xlu0 %745
    %v748 = vmul.f32 %v742, %v746
    %750 = vrot.lane.b32.xlu0 %v748, 32
    %v751 = vpop.permute.xlu0 %750
    %v753 = vadd.f32 %v743, %v751
    %v754 = vtanh.pop %v753
    %756 = vrot.lane.b32.xlu0 %v754, 64
    %v757 = vpop.permute.xlu0 %756
    %v759 = vmul.f32 %v742, %v757
    %761 = vrot.lane.b32.xlu0 %v759, 32
    %v762 = vpop.permute.xlu0 %761
    %v763 = vsel %vm179, %v762, 0
    %765 = vmatprep.subr.mxu0 0.0
    %766 = vmatpush1.msra.mxu0 %v168
    %767 = vmatprep.subr.mxu0 0.0
    %768 = vmatpush1.msra.mxu0 %v169
    %769 = vmatprep.subr.mxu0 0.0
    %770 = vmatpush1.msra.mxu0 %v170
    %771 = vmatprep.subr.mxu0 0.0
    %772 = vmatpush1.msra.mxu0 %v171
    %773 = vmatprep.subr.mxu0 0.0
    %774 = vmatpush1.msra.mxu0 0.0
    %775 = vmatprep.subr.mxu0 0.0
    %776 = vmatpush1.msra.mxu0 0.0
    %777 = vmatprep.subr.mxu0 0.0
    %778 = vmatpush1.msra.mxu0 0.0
    %779 = vmatprep.subr.mxu0 0.0
    %780 = vmatpush1.msra.mxu0 0.0
    %781 = vmatprep.subr.mxu0 0.0
    %782 = vmatpush1.msra.mxu0 0.0
    %783 = vmatprep.subr.mxu0 0.0
    %784 = vmatpush1.msra.mxu0 0.0
    %785 = vmatprep.subr.mxu0 0.0
    %786 = vmatpush1.msra.mxu0 0.0
    %787 = vmatprep.subr.mxu0 0.0
    %788 = vmatpush1.msra.mxu0 0.0
    %789 = vmatprep.subr.mxu0 0.0
    %790 = vmatpush1.msra.mxu0 0.0
    %791 = vmatprep.subr.mxu0 0.0
    %792 = vmatpush1.msra.mxu0 0.0
    %793 = vmatprep.subr.mxu0 0.0
    %794 = vmatpush1.msra.mxu0 0.0
    %795 = vmatprep.subr.mxu0 0.0
    %796 = vmatpush1.msra.mxu0 0.0
    %797 = vmatprep.subr.mxu0 0.0
    %798 = vmatpush1.msra.mxu0 0.0
    %799 = vmatprep.subr.mxu0 0.0
    %800 = vmatpush1.msra.mxu0 0.0
    %801 = vmatprep.subr.mxu0 0.0
    %802 = vmatpush1.msra.mxu0 0.0
    %803 = vmatprep.subr.mxu0 0.0
    %804 = vmatpush1.msra.mxu0 0.0
    %805 = vmatprep.subr.mxu0 0.0
    %806 = vmatpush1.msra.mxu0 0.0
    %807 = vmatprep.subr.mxu0 0.0
    %808 = vmatpush1.msra.mxu0 0.0
    %809 = vmatprep.subr.mxu0 0.0
    %810 = vmatpush1.msra.mxu0 0.0
    %811 = vmatprep.subr.mxu0 0.0
    %812 = vmatpush1.msra.mxu0 0.0
    %813 = vmatprep.subr.mxu0 0.0
    %814 = vmatpush1.msra.mxu0 0.0
    %815 = vmatprep.subr.mxu0 0.0
    %816 = vmatpush1.msra.mxu0 0.0
    %817 = vmatprep.subr.mxu0 0.0
    %818 = vmatpush1.msra.mxu0 0.0
    %819 = vmatprep.subr.mxu0 0.0
    %820 = vmatpush1.msra.mxu0 0.0
    %821 = vmatprep.subr.mxu0 0.0
    %822 = vmatpush1.msra.mxu0 0.0
    %823 = vmatprep.subr.mxu0 0.0
    %824 = vmatpush1.msra.mxu0 0.0
    %825 = vmatprep.subr.mxu0 0.0
    %826 = vmatpush1.msra.mxu0 0.0
    %827 = vmatprep.subr.mxu0 0.0
    %828 = vmatpush1.msra.mxu0 0.0
    %829 = vmatprep.mubr.f32.mxu0 0.0
    %830 = vmatmul.mubr.f32.gmra.mrb[0].mxu0 %v763
    %v831 = vpop.f32.mrb[0].mxu0
    %v832 = vadd.f32 0.0, %v831
    %v833 = vpop.f32.mrb[0].mxu0
    %834 = vdwg.mxu0
    %v835 = vadd.f32 %v160, %v832
    %v836 = vmul.f32 %v835, %v177
    %v837 = vtanh.pop %v836
    %v838 = vmul.f32 %v837, %v177
    %v839 = vadd.f32 %v838, %v178
    %v840 = vmul.f32 %v839, %v753
    %842 = vrot.lane.b32.xlu0 %v839, 64
    %v843 = vpop.permute.xlu0 %842
    %v845 = vmul.f32 %v839, %v843
    %847 = vrot.lane.b32.xlu0 %v845, 32
    %v848 = vpop.permute.xlu0 %847
    %v850 = vadd.f32 %v840, %v848
    %v851 = vtanh.pop %v850
    %853 = vrot.lane.b32.xlu0 %v851, 64
    %v854 = vpop.permute.xlu0 %853
    %v856 = vmul.f32 %v839, %v854
    %858 = vrot.lane.b32.xlu0 %v856, 32
    %v859 = vpop.permute.xlu0 %858
    %v860 = vsel %vm179, %v859, 0
    %862 = vmatprep.subr.mxu0 0.0
    %863 = vmatpush1.msra.mxu0 %v168
    %864 = vmatprep.subr.mxu0 0.0
    %865 = vmatpush1.msra.mxu0 %v169
    %866 = vmatprep.subr.mxu0 0.0
    %867 = vmatpush1.msra.mxu0 %v170
    %868 = vmatprep.subr.mxu0 0.0
    %869 = vmatpush1.msra.mxu0 %v171
    %870 = vmatprep.subr.mxu0 0.0
    %871 = vmatpush1.msra.mxu0 0.0
    %872 = vmatprep.subr.mxu0 0.0
    %873 = vmatpush1.msra.mxu0 0.0
    %874 = vmatprep.subr.mxu0 0.0
    %875 = vmatpush1.msra.mxu0 0.0
    %876 = vmatprep.subr.mxu0 0.0
    %877 = vmatpush1.msra.mxu0 0.0
    %878 = vmatprep.subr.mxu0 0.0
    %879 = vmatpush1.msra.mxu0 0.0
    %880 = vmatprep.subr.mxu0 0.0
    %881 = vmatpush1.msra.mxu0 0.0
    %882 = vmatprep.subr.mxu0 0.0
    %883 = vmatpush1.msra.mxu0 0.0
    %884 = vmatprep.subr.mxu0 0.0
    %885 = vmatpush1.msra.mxu0 0.0
    %886 = vmatprep.subr.mxu0 0.0
    %887 = vmatpush1.msra.mxu0 0.0
    %888 = vmatprep.subr.mxu0 0.0
    %889 = vmatpush1.msra.mxu0 0.0
    %890 = vmatprep.subr.mxu0 0.0
    %891 = vmatpush1.msra.mxu0 0.0
    %892 = vmatprep.subr.mxu0 0.0
    %893 = vmatpush1.msra.mxu0 0.0
    %894 = vmatprep.subr.mxu0 0.0
    %895 = vmatpush1.msra.mxu0 0.0
    %896 = vmatprep.subr.mxu0 0.0
    %897 = vmatpush1.msra.mxu0 0.0
    %898 = vmatprep.subr.mxu0 0.0
    %899 = vmatpush1.msra.mxu0 0.0
    %900 = vmatprep.subr.mxu0 0.0
    %901 = vmatpush1.msra.mxu0 0.0
    %902 = vmatprep.subr.mxu0 0.0
    %903 = vmatpush1.msra.mxu0 0.0
    %904 = vmatprep.subr.mxu0 0.0
    %905 = vmatpush1.msra.mxu0 0.0
    %906 = vmatprep.subr.mxu0 0.0
    %907 = vmatpush1.msra.mxu0 0.0
    %908 = vmatprep.subr.mxu0 0.0
    %909 = vmatpush1.msra.mxu0 0.0
    %910 = vmatprep.subr.mxu0 0.0
    %911 = vmatpush1.msra.mxu0 0.0
    %912 = vmatprep.subr.mxu0 0.0
    %913 = vmatpush1.msra.mxu0 0.0
    %914 = vmatprep.subr.mxu0 0.0
    %915 = vmatpush1.msra.mxu0 0.0
    %916 = vmatprep.subr.mxu0 0.0
    %917 = vmatpush1.msra.mxu0 0.0
    %918 = vmatprep.subr.mxu0 0.0
    %919 = vmatpush1.msra.mxu0 0.0
    %920 = vmatprep.subr.mxu0 0.0
    %921 = vmatpush1.msra.mxu0 0.0
    %922 = vmatprep.subr.mxu0 0.0
    %923 = vmatpush1.msra.mxu0 0.0
    %924 = vmatprep.subr.mxu0 0.0
    %925 = vmatpush1.msra.mxu0 0.0
    %926 = vmatprep.mubr.f32.mxu0 0.0
    %927 = vmatmul.mubr.f32.gmra.mrb[0].mxu0 %v860
    %v928 = vpop.f32.mrb[0].mxu0
    %v929 = vadd.f32 0.0, %v928
    %v930 = vpop.f32.mrb[0].mxu0
    %931 = vdwg.mxu0
    %v932 = vadd.f32 %v165, %v929
    %v933 = vmul.f32 %v932, %v177
    %v934 = vtanh.pop %v933
    %v935 = vmul.f32 %v934, %v177
    %v936 = vadd.f32 %v935, %v178
    %v937 = vmul.f32 %v936, %v850
    %939 = vrot.lane.b32.xlu0 %v936, 64
    %v940 = vpop.permute.xlu0 %939
    %v942 = vmul.f32 %v936, %v940
    %944 = vrot.lane.b32.xlu0 %v942, 32
    %v945 = vpop.permute.xlu0 %944
    %v947 = vadd.f32 %v937, %v945
    %v948 = vtanh.pop %v947
    %950 = vrot.lane.b32.xlu0 %v948, 64
    %v951 = vpop.permute.xlu0 %950
    %v953 = vmul.f32 %v936, %v951
    %955 = vrot.lane.b32.xlu0 %v953, 32
    %v956 = vpop.permute.xlu0 %955
    %958 = vst.msk [vmem:[#allocation2] sm:$0xff] %vm179, %v956
    // Predicated region
    $region18: #{tpu_custom_call.1} parent=1 // pred_check
      _
    $region19: #{tpu_custom_call.1} parent=1 // pred_check_branch
      %960 = sbr.rel (0) target = $region21
    $region20: #{tpu_custom_call.1} parent=1 // pred_region
      %s962 = ssub.s32 128, 128
      %963 = vsyncadd [#allocation3], %s962
      %s965 = sshll.u32 [#allocation2], 4
      %s966 = int_to_ptr.vmem [resolvable:$true] %s965
      %968 = dma.vmem_to_hbm [thread:$0]  %s966, 128, %s4, [#allocation3]
    $region21: #{tpu_custom_call.1} parent=1 // pred_fallthru
      _
    // Predicated region
    $region22: #{tpu_custom_call.1} parent=1 // pred_check
      _
    $region23: #{tpu_custom_call.1} parent=1 // pred_check_branch
      %970 = sbr.rel (0) target = $region25
    $region24: #{tpu_custom_call.1} parent=1 // pred_region
      %971 = dma.done [#allocation3], 128
    $region25: #{tpu_custom_call.1} parent=1 // pred_fallthru
      _
    %972 = vsyncpa [#allocation3], 1

</llo_original>
